<compile_context>
chip_gen: v5e
topology: v5e:2x2
jax: 0.10.0
libtpu: 0.0.40
codegen_flags: <defaults>
</compile_context>

<pallas_src>
import jax
import jax.numpy as jnp
from jax.experimental import pallas as pl
from jax.experimental.pallas import tpu as pltpu

# -----------------------------------------------------------------------------
# Config (small synthetic shapes; BATCH kept a multiple of the f32 sublane (8))
# -----------------------------------------------------------------------------
BATCH = 8          # batch size for both source and target
CHANS = 4          # EEG channels
SAMPLES = 32       # EEG time samples
DIN = 1 * CHANS * SAMPLES   # flattened input dim = 128 (one full lane tile)
FEAT_DIM = 32      # backbone output feature dim
NUM_CLASS = 2
LOSS_WEIGHT0 = 0.7          # kwargs['loss_weight'][0] -> CE class weights [0.7, 1.0]
KERNEL_MUL = 2.0            # MMD multi-kernel params (standard MMDLoss defaults)
KERNEL_NUM = 5

_VMEM = pl.BlockSpec(memory_space=pltpu.MemorySpace.VMEM)

# Packed-parameter row layout (width = FEAT_DIM lanes):
#   row 0                      : b_feat                       (FEAT_DIM lanes)
#   rows 1 .. NUM_CLASS        : w_clf^T                      (NUM_CLASS x FEAT_DIM)
#   row 1+NUM_CLASS            : b_clf   (lanes [0:NUM_CLASS], rest 0)
#   row 2+NUM_CLASS            : class_w (lanes [0:NUM_CLASS], rest 0)
_ROW_BF = 0
_ROW_WCLF = 1
_ROW_BCLF = 1 + NUM_CLASS
_ROW_CW = 2 + NUM_CLASS
_PACK_ROWS = 3 + NUM_CLASS

# Advisory cost estimate (latency-bound kernel; lets XLA overlap the custom call).
_N2 = 2 * BATCH
_FLOPS = (2 * _N2 * DIN * FEAT_DIM          # backbone matmul
          + 2 * BATCH * FEAT_DIM * NUM_CLASS  # classifier
          + 2 * _N2 * _N2 * FEAT_DIM        # MMD gram
          + 2 * _N2 * FEAT_DIM              # sum-of-squares row matmul
          + 10 * _N2 * _N2)                 # MMD elementwise (approx)
_TRANS = _N2 * FEAT_DIM + BATCH * NUM_CLASS + KERNEL_NUM * _N2 * _N2
_BYTES = 4 * (2 * BATCH * DIN + BATCH + DIN * FEAT_DIM + _PACK_ROWS * FEAT_DIM + 2)


# -----------------------------------------------------------------------------
# Fused kernel: backbone (stacked src+tgt) -> classifier + weighted CE -> MMD
# -----------------------------------------------------------------------------
def _transfernet_kernel(xs_ref, xt_ref, lab_ref, wf_ref, p_ref, loss_ref):
    # ---- unpack the small packed parameters (tiny static slices) ----
    b_feat = p_ref[_ROW_BF:_ROW_BF + 1, :]                         # (1, F)
    w_clf_t = p_ref[_ROW_WCLF:_ROW_WCLF + NUM_CLASS, :]            # (C, F)
    b_clf = p_ref[_ROW_BCLF:_ROW_BCLF + 1, 0:NUM_CLASS]            # (1, C)
    class_w = p_ref[_ROW_CW:_ROW_CW + 1, 0:NUM_CLASS]              # (1, C)

    # ---- backbone stand-in: one matmul over the stacked [source; target] batch ----
    # Stack in f32 (8+8 rows, sublane aligned), then cast MXU operands to bf16.
    x = jnp.concatenate([xs_ref[...], xt_ref[...]], axis=0)        # (2B, DIN) f32
    h = jnp.dot(x.astype(jnp.bfloat16),
                wf_ref[...].astype(jnp.bfloat16),
                preferred_element_type=jnp.float32) + b_feat       # (2B, F) f32
    # ELU in f32; exp only on the non-positive branch (no transient inf).
    feat = jnp.where(h > 0.0, h, jnp.exp(jnp.minimum(h, 0.0)) - 1.0)

    n = feat.shape[0]
    half = n // 2                                                  # == B

    # ---- classifier_layer + weighted CrossEntropyLoss (reduction='mean'), source half ----
    src_feat = feat[:half, :]                                      # (B, F)
    logits = jax.lax.dot_general(src_feat, w_clf_t, (((1,), (1,)), ((), ())),
                                 preferred_element_type=jnp.float32) + b_clf  # (B, C)

    m = jnp.max(logits, axis=-1, keepdims=True)
    z = logits - m
    lse = jnp.log(jnp.sum(jnp.exp(z), axis=-1, keepdims=True))
    logp = z - lse                                                 # (B, C)

    labels = lab_ref[...]                                          # (B, 1) int32
    class_ids = jax.lax.broadcasted_iota(jnp.int32, (half, NUM_CLASS), 1)
    onehot = (labels == class_ids).astype(jnp.float32)             # (B, C)

    nll = -jnp.sum(onehot * logp, axis=-1, keepdims=True)          # (B, 1)
    w_i = jnp.sum(onehot * class_w, axis=-1, keepdims=True)        # (B, 1)
    clf_loss = jnp.sum(w_i * nll) / jnp.sum(w_i)

    # ---- multi-kernel Gaussian MMD over the full (2B, F) feature slab ----
    feat_bf = feat.astype(jnp.bfloat16)
    gram = jax.lax.dot_general(feat_bf, feat_bf, (((1,), (1,)), ((), ())),
                               preferred_element_type=jnp.float32)  # (2B, 2B)
    feat_sq = feat * feat
    sq_col = jnp.sum(feat_sq, axis=-1, keepdims=True)               # (2B, 1)
    # Row form via a ones-vector matmul (MXU) instead of an XLU transpose.
    sq_row = jax.lax.dot_general(jnp.ones((1, FEAT_DIM), jnp.float32), feat_sq,
                                 (((1,), (1,)), ((), ())),
                                 preferred_element_type=jnp.float32)  # (1, 2B)
    # clamp: fp cancellation can make the pairwise distance slightly negative
    l2 = jnp.maximum(sq_col + sq_row - 2.0 * gram, 0.0)

    # bandwidth = sum(L2) / (n^2 - n) / kernel_mul**(kernel_num // 2), eps-floored;
    # one scalar reciprocal -> per-kernel scalar-scaled multiplies (no full-tile vdiv).
    bandwidth = jnp.sum(l2) * (1.0 / (float(n * n - n)
                                      * (KERNEL_MUL ** (KERNEL_NUM // 2))))
    inv_bw = 1.0 / jnp.maximum(bandwidth, 1e-12)

    # sign[i,j] = +1 on the XX / YY quadrants, -1 on XY / YX; mean over (half*half)
    # entries of each quadrant == sum(sign * K) / half^2.  No lane-slicing of K.
    ri = jax.lax.broadcasted_iota(jnp.int32, (n, n), 0)
    ci = jax.lax.broadcasted_iota(jnp.int32, (n, n), 1)
    sign = (jnp.where(ri < half, 1.0, -1.0) * jnp.where(ci < half, 1.0, -1.0))

    acc = jnp.float32(0.0)
    for i in range(KERNEL_NUM):
        scale = -(KERNEL_MUL ** (-float(i))) * inv_bw               # traced scalar
        acc = acc + jnp.sum(sign * jnp.exp(l2 * scale))
    transfer_loss = acc * (1.0 / float(half * half))

    # single store of the (1, 2) loss vector: [clf_loss, transfer_loss]
    lane = jax.lax.broadcasted_iota(jnp.int32, (1, 2), 1)
    loss_ref[...] = jnp.where(lane == 0, clf_loss, transfer_loss)


# -----------------------------------------------------------------------------
# Parameters (small params pre-packed once) + TransferNet forward
# -----------------------------------------------------------------------------
def init_params(key):
    k1, k2, k3 = jax.random.split(key, 3)
    w_feat = jax.random.normal(k1, (DIN, FEAT_DIM), jnp.float32) * 0.05
    b_feat = jnp.zeros((1, FEAT_DIM), jnp.float32)
    # classifier nn.Linear(feature_dim, num_class)
    w_clf = jax.random.normal(k2, (FEAT_DIM, NUM_CLASS), jnp.float32) * 0.1
    b_clf = jax.random.normal(k3, (1, NUM_CLASS), jnp.float32) * 0.01
    # CE class weights: [loss_weight[0], 1.0]
    class_w = jnp.array([[LOSS_WEIGHT0, 1.0]], jnp.float32)

    pad = lambda a: jnp.pad(a, ((0, 0), (0, FEAT_DIM - NUM_CLASS)))
    packed = jnp.concatenate([b_feat, w_clf.T, pad(b_clf), pad(class_w)], axis=0)
    return {"w_feat": w_feat, "packed": packed}   # packed: (3+C, FEAT_DIM) f32


@jax.jit
def transfer_net_forward(params, source, target, source_label):
    B = source.shape[0]
    # flatten NCHW -> (B, Din); NO wrapper-side concat — kernel stacks src/tgt itself
    src_flat = source.reshape(B, -1).astype(jnp.float32)
    tgt_flat = target.reshape(B, -1).astype(jnp.float32)
    labels_2d = source_label.astype(jnp.int32).reshape(B, 1)

    losses = pl.pallas_call(
        _transfernet_kernel,
        out_shape=jax.ShapeDtypeStruct((1, 2), jnp.float32),
        in_specs=[_VMEM] * 5,
        out_specs=_VMEM,
        cost_estimate=pl.CostEstimate(flops=_FLOPS, transcendentals=_TRANS,
                                      bytes_accessed=_BYTES),
    )(src_flat, tgt_flat, labels_2d, params["w_feat"], params["packed"])

    return losses[0, 0], losses[0, 1]


if __name__ == "__main__":
    key = jax.random.PRNGKey(0)
    kp, ks, kt, kl = jax.random.split(key, 4)

    params = init_params(kp)
    source = jax.random.normal(ks, (BATCH, 1, CHANS, SAMPLES), jnp.float32)
    target = jax.random.normal(kt, (BATCH, 1, CHANS, SAMPLES), jnp.float32)
    source_label = jax.random.randint(kl, (BATCH,), 0, NUM_CLASS, jnp.int32)

    clf_loss, transfer_loss = transfer_net_forward(params, source, target, source_label)
    jax.block_until_ready((clf_loss, transfer_loss))

    assert jnp.isfinite(clf_loss) and jnp.isfinite(transfer_loss)
    print("KERNEL_OK")
</pallas_src>

<mosaic_0001>
module attributes {stable_mosaic.version = 11 : i64} {
  func.func @_transfernet_kernel(%arg0: memref<8x128xf32, #tpu.memory_space<vmem>>, %arg1: memref<8x128xf32, #tpu.memory_space<vmem>>, %arg2: memref<8x1xi32, #tpu.memory_space<vmem>>, %arg3: memref<128x32xf32, #tpu.memory_space<vmem>>, %arg4: memref<5x32xf32, #tpu.memory_space<vmem>>, %arg5: memref<1x2xf32, #tpu.memory_space<vmem>>) attributes {dimension_semantics = [], scalar_prefetch = 0 : i64, scratch_operands = 0 : i64, tpu.core_type = #tpu.core_type<tc>} {
    %c0 = arith.constant 0 : index
    %c0_0 = arith.constant 0 : index
    %0 = vector.load %arg4[%c0, %c0_0] : memref<5x32xf32, #tpu.memory_space<vmem>>, vector<1x32xf32>
    %c1 = arith.constant 1 : index
    %c0_1 = arith.constant 0 : index
    %1 = vector.load %arg4[%c1, %c0_1] : memref<5x32xf32, #tpu.memory_space<vmem>>, vector<2x32xf32>
    %c3 = arith.constant 3 : index
    %c0_2 = arith.constant 0 : index
    %2 = vector.load %arg4[%c3, %c0_2] : memref<5x32xf32, #tpu.memory_space<vmem>>, vector<1x2xf32>
    %c4 = arith.constant 4 : index
    %c0_3 = arith.constant 0 : index
    %3 = vector.load %arg4[%c4, %c0_3] : memref<5x32xf32, #tpu.memory_space<vmem>>, vector<1x2xf32>
    %c0_4 = arith.constant 0 : index
    %c0_5 = arith.constant 0 : index
    %4 = vector.load %arg0[%c0_4, %c0_5] : memref<8x128xf32, #tpu.memory_space<vmem>>, vector<8x128xf32>
    %c0_6 = arith.constant 0 : index
    %c0_7 = arith.constant 0 : index
    %5 = vector.load %arg1[%c0_6, %c0_7] : memref<8x128xf32, #tpu.memory_space<vmem>>, vector<8x128xf32>
    %6 = tpu.concatenate %4, %5 in 0 : vector<8x128xf32>, vector<8x128xf32> -> vector<16x128xf32>
    %7 = arith.truncf %6 : vector<16x128xf32> to vector<16x128xbf16>
    %c0_8 = arith.constant 0 : index
    %c0_9 = arith.constant 0 : index
    %8 = vector.load %arg3[%c0_8, %c0_9] : memref<128x32xf32, #tpu.memory_space<vmem>>, vector<128x32xf32>
    %9 = arith.truncf %8 : vector<128x32xf32> to vector<128x32xbf16>
    %cst = arith.constant dense<0.000000e+00> : vector<16x32xf32>
    %10 = tpu.matmul %7, %9, %cst {dimension_numbers = #tpu.dot_dimension_numbers<[1], [0], [0], [1], [0, 0, 1, 1], [], []>} : vector<16x128xbf16>, vector<128x32xbf16>, vector<16x32xf32> -> vector<16x32xf32>
    %11 = vector.broadcast %0 : vector<1x32xf32> to vector<16x32xf32>
    %12 = arith.addf %10, %11 : vector<16x32xf32>
    %cst_10 = arith.constant 0.000000e+00 : f32
    %13 = vector.broadcast %cst_10 : f32 to vector<16x32xf32>
    %14 = arith.cmpf ogt, %12, %13 : vector<16x32xf32>
    %cst_11 = arith.constant 0.000000e+00 : f32
    %15 = vector.broadcast %cst_11 : f32 to vector<16x32xf32>
    %16 = arith.minimumf %12, %15 : vector<16x32xf32>
    %17 = math.exp %16 : vector<16x32xf32>
    %cst_12 = arith.constant 1.000000e+00 : f32
    %18 = vector.broadcast %cst_12 : f32 to vector<16x32xf32>
    %19 = arith.subf %17, %18 : vector<16x32xf32>
    %20 = arith.select %14, %12, %19 : vector<16x32xi1>, vector<16x32xf32>
    %21 = vector.extract_strided_slice %20 {offsets = [0, 0], sizes = [8, 32], strides = [1, 1]} : vector<16x32xf32> to vector<8x32xf32>
    %cst_13 = arith.constant dense<0.000000e+00> : vector<8x2xf32>
    %22 = tpu.matmul %21, %1, %cst_13 {dimension_numbers = #tpu.dot_dimension_numbers<[1], [1], [0], [0], [0, 0, 1, 0], [], []>} : vector<8x32xf32>, vector<2x32xf32>, vector<8x2xf32> -> vector<8x2xf32>
    %23 = vector.broadcast %2 : vector<1x2xf32> to vector<8x2xf32>
    %24 = arith.addf %22, %23 : vector<8x2xf32>
    %cst_14 = arith.constant dense<0xFF800000> : vector<8xf32>
    %25 = vector.multi_reduction <maximumf>, %24, %cst_14 [1] : vector<8x2xf32> to vector<8xf32>
    %26 = vector.shape_cast %25 : vector<8xf32> to vector<8x1xf32>
    %27 = vector.broadcast %26 : vector<8x1xf32> to vector<8x2xf32>
    %28 = arith.subf %24, %27 : vector<8x2xf32>
    %29 = math.exp %28 : vector<8x2xf32>
    %cst_15 = arith.constant dense<0.000000e+00> : vector<8xf32>
    %30 = vector.multi_reduction <add>, %29, %cst_15 [1] : vector<8x2xf32> to vector<8xf32>
    %31 = vector.shape_cast %30 : vector<8xf32> to vector<8x1xf32>
    %32 = math.log %31 : vector<8x1xf32>
    %33 = vector.broadcast %32 : vector<8x1xf32> to vector<8x2xf32>
    %34 = arith.subf %28, %33 : vector<8x2xf32>
    %c0_16 = arith.constant 0 : index
    %c0_17 = arith.constant 0 : index
    %35 = vector.load %arg2[%c0_16, %c0_17] : memref<8x1xi32, #tpu.memory_space<vmem>>, vector<8x1xi32>
    %36 = tpu.iota {dimensions = array<i32: 1>} : vector<8x2xi32>
    %37 = vector.broadcast %35 : vector<8x1xi32> to vector<8x2xi32>
    %38 = arith.cmpi eq, %37, %36 : vector<8x2xi32>
    %39 = arith.extui %38 : vector<8x2xi1> to vector<8x2xi32>
    %40 = arith.sitofp %39 : vector<8x2xi32> to vector<8x2xf32>
    %41 = arith.mulf %40, %34 : vector<8x2xf32>
    %cst_18 = arith.constant dense<0.000000e+00> : vector<8xf32>
    %42 = vector.multi_reduction <add>, %41, %cst_18 [1] : vector<8x2xf32> to vector<8xf32>
    %43 = vector.shape_cast %42 : vector<8xf32> to vector<8x1xf32>
    %cst_19 = arith.constant 0.000000e+00 : f32
    %44 = vector.broadcast %cst_19 : f32 to vector<8x1xf32>
    %45 = arith.subf %44, %43 : vector<8x1xf32>
    %46 = vector.broadcast %3 : vector<1x2xf32> to vector<8x2xf32>
    %47 = arith.mulf %40, %46 : vector<8x2xf32>
    %cst_20 = arith.constant dense<0.000000e+00> : vector<8xf32>
    %48 = vector.multi_reduction <add>, %47, %cst_20 [1] : vector<8x2xf32> to vector<8xf32>
    %49 = vector.shape_cast %48 : vector<8xf32> to vector<8x1xf32>
    %50 = arith.mulf %49, %45 : vector<8x1xf32>
    %51 = vector.shape_cast %50 : vector<8x1xf32> to vector<1x8x1xf32>
    %cst_21 = arith.constant dense<0.000000e+00> : vector<1xf32>
    %52 = vector.multi_reduction <add>, %51, %cst_21 [1, 2] : vector<1x8x1xf32> to vector<1xf32>
    %53 = vector.shape_cast %52 : vector<1xf32> to vector<1x1x1xf32>
    %54 = vector.extract %53[0, 0, 0] : f32 from vector<1x1x1xf32>
    %55 = vector.shape_cast %49 : vector<8x1xf32> to vector<1x8x1xf32>
    %cst_22 = arith.constant dense<0.000000e+00> : vector<1xf32>
    %56 = vector.multi_reduction <add>, %55, %cst_22 [1, 2] : vector<1x8x1xf32> to vector<1xf32>
    %57 = vector.shape_cast %56 : vector<1xf32> to vector<1x1x1xf32>
    %58 = vector.extract %57[0, 0, 0] : f32 from vector<1x1x1xf32>
    %59 = arith.divf %54, %58 : f32
    %60 = arith.truncf %20 : vector<16x32xf32> to vector<16x32xbf16>
    %cst_23 = arith.constant dense<0.000000e+00> : vector<16x16xf32>
    %61 = tpu.matmul %60, %60, %cst_23 {dimension_numbers = #tpu.dot_dimension_numbers<[1], [1], [0], [0], [0, 0, 1, 0], [], []>} : vector<16x32xbf16>, vector<16x32xbf16>, vector<16x16xf32> -> vector<16x16xf32>
    %62 = arith.mulf %20, %20 : vector<16x32xf32>
    %cst_24 = arith.constant dense<0.000000e+00> : vector<16xf32>
    %63 = vector.multi_reduction <add>, %62, %cst_24 [1] : vector<16x32xf32> to vector<16xf32>
    %64 = vector.shape_cast %63 : vector<16xf32> to vector<16x1xf32>
    %cst_25 = arith.constant 1.000000e+00 : f32
    %65 = vector.broadcast %cst_25 : f32 to vector<1x32xf32>
    %cst_26 = arith.constant dense<0.000000e+00> : vector<1x16xf32>
    %66 = tpu.matmul %65, %62, %cst_26 {dimension_numbers = #tpu.dot_dimension_numbers<[1], [1], [0], [0], [0, 0, 1, 0], [], []>} : vector<1x32xf32>, vector<16x32xf32>, vector<1x16xf32> -> vector<1x16xf32>
    %67 = vector.broadcast %64 : vector<16x1xf32> to vector<16x16xf32>
    %68 = vector.broadcast %66 : vector<1x16xf32> to vector<16x16xf32>
    %69 = arith.addf %67, %68 : vector<16x16xf32>
    %cst_27 = arith.constant 2.000000e+00 : f32
    %70 = vector.broadcast %cst_27 : f32 to vector<16x16xf32>
    %71 = arith.mulf %70, %61 : vector<16x16xf32>
    %72 = arith.subf %69, %71 : vector<16x16xf32>
    %cst_28 = arith.constant 0.000000e+00 : f32
    %73 = vector.broadcast %cst_28 : f32 to vector<16x16xf32>
    %74 = arith.maximumf %72, %73 : vector<16x16xf32>
    %75 = vector.shape_cast %74 : vector<16x16xf32> to vector<1x16x16xf32>
    %cst_29 = arith.constant dense<0.000000e+00> : vector<1xf32>
    %76 = vector.multi_reduction <add>, %75, %cst_29 [1, 2] : vector<1x16x16xf32> to vector<1xf32>
    %77 = vector.shape_cast %76 : vector<1xf32> to vector<1x1x1xf32>
    %78 = vector.extract %77[0, 0, 0] : f32 from vector<1x1x1xf32>
    %cst_30 = arith.constant 0.00104166672 : f32
    %79 = arith.mulf %78, %cst_30 : f32
    %cst_31 = arith.constant 9.99999996E-13 : f32
    %80 = arith.maximumf %79, %cst_31 : f32
    %cst_32 = arith.constant 1.000000e+00 : f32
    %81 = arith.divf %cst_32, %80 : f32
    %82 = tpu.iota {dimensions = array<i32: 0>} : vector<16x16xi32>
    %83 = tpu.iota {dimensions = array<i32: 1>} : vector<16x16xi32>
    %c8_i32 = arith.constant 8 : i32
    %84 = vector.broadcast %c8_i32 : i32 to vector<16x16xi32>
    %85 = arith.cmpi slt, %82, %84 : vector<16x16xi32>
    %cst_33 = arith.constant 1.000000e+00 : f32
    %cst_34 = arith.constant -1.000000e+00 : f32
    %86 = vector.broadcast %cst_33 : f32 to vector<16x16xf32>
    %87 = vector.broadcast %cst_34 : f32 to vector<16x16xf32>
    %88 = arith.select %85, %86, %87 : vector<16x16xi1>, vector<16x16xf32>
    %c8_i32_35 = arith.constant 8 : i32
    %89 = vector.broadcast %c8_i32_35 : i32 to vector<16x16xi32>
    %90 = arith.cmpi slt, %83, %89 : vector<16x16xi32>
    %cst_36 = arith.constant 1.000000e+00 : f32
    %cst_37 = arith.constant -1.000000e+00 : f32
    %91 = vector.broadcast %cst_36 : f32 to vector<16x16xf32>
    %92 = vector.broadcast %cst_37 : f32 to vector<16x16xf32>
    %93 = arith.select %90, %91, %92 : vector<16x16xi1>, vector<16x16xf32>
    %94 = arith.mulf %88, %93 : vector<16x16xf32>
    %cst_38 = arith.constant -1.000000e+00 : f32
    %95 = arith.mulf %cst_38, %81 : f32
    %96 = vector.broadcast %95 : f32 to vector<16x16xf32>
    %97 = arith.mulf %74, %96 : vector<16x16xf32>
    %98 = math.exp %97 : vector<16x16xf32>
    %99 = arith.mulf %94, %98 : vector<16x16xf32>
    %100 = vector.shape_cast %99 : vector<16x16xf32> to vector<1x16x16xf32>
    %cst_39 = arith.constant dense<0.000000e+00> : vector<1xf32>
    %101 = vector.multi_reduction <add>, %100, %cst_39 [1, 2] : vector<1x16x16xf32> to vector<1xf32>
    %102 = vector.shape_cast %101 : vector<1xf32> to vector<1x1x1xf32>
    %103 = vector.extract %102[0, 0, 0] : f32 from vector<1x1x1xf32>
    %cst_40 = arith.constant 0.000000e+00 : f32
    %104 = arith.addf %cst_40, %103 : f32
    %cst_41 = arith.constant -5.000000e-01 : f32
    %105 = arith.mulf %cst_41, %81 : f32
    %106 = vector.broadcast %105 : f32 to vector<16x16xf32>
    %107 = arith.mulf %74, %106 : vector<16x16xf32>
    %108 = math.exp %107 : vector<16x16xf32>
    %109 = arith.mulf %94, %108 : vector<16x16xf32>
    %110 = vector.shape_cast %109 : vector<16x16xf32> to vector<1x16x16xf32>
    %cst_42 = arith.constant dense<0.000000e+00> : vector<1xf32>
    %111 = vector.multi_reduction <add>, %110, %cst_42 [1, 2] : vector<1x16x16xf32> to vector<1xf32>
    %112 = vector.shape_cast %111 : vector<1xf32> to vector<1x1x1xf32>
    %113 = vector.extract %112[0, 0, 0] : f32 from vector<1x1x1xf32>
    %114 = arith.addf %104, %113 : f32
    %cst_43 = arith.constant -2.500000e-01 : f32
    %115 = arith.mulf %cst_43, %81 : f32
    %116 = vector.broadcast %115 : f32 to vector<16x16xf32>
    %117 = arith.mulf %74, %116 : vector<16x16xf32>
    %118 = math.exp %117 : vector<16x16xf32>
    %119 = arith.mulf %94, %118 : vector<16x16xf32>
    %120 = vector.shape_cast %119 : vector<16x16xf32> to vector<1x16x16xf32>
    %cst_44 = arith.constant dense<0.000000e+00> : vector<1xf32>
    %121 = vector.multi_reduction <add>, %120, %cst_44 [1, 2] : vector<1x16x16xf32> to vector<1xf32>
    %122 = vector.shape_cast %121 : vector<1xf32> to vector<1x1x1xf32>
    %123 = vector.extract %122[0, 0, 0] : f32 from vector<1x1x1xf32>
    %124 = arith.addf %114, %123 : f32
    %cst_45 = arith.constant -1.250000e-01 : f32
    %125 = arith.mulf %cst_45, %81 : f32
    %126 = vector.broadcast %125 : f32 to vector<16x16xf32>
    %127 = arith.mulf %74, %126 : vector<16x16xf32>
    %128 = math.exp %127 : vector<16x16xf32>
    %129 = arith.mulf %94, %128 : vector<16x16xf32>
    %130 = vector.shape_cast %129 : vector<16x16xf32> to vector<1x16x16xf32>
    %cst_46 = arith.constant dense<0.000000e+00> : vector<1xf32>
    %131 = vector.multi_reduction <add>, %130, %cst_46 [1, 2] : vector<1x16x16xf32> to vector<1xf32>
    %132 = vector.shape_cast %131 : vector<1xf32> to vector<1x1x1xf32>
    %133 = vector.extract %132[0, 0, 0] : f32 from vector<1x1x1xf32>
    %134 = arith.addf %124, %133 : f32
    %cst_47 = arith.constant -6.250000e-02 : f32
    %135 = arith.mulf %cst_47, %81 : f32
    %136 = vector.broadcast %135 : f32 to vector<16x16xf32>
    %137 = arith.mulf %74, %136 : vector<16x16xf32>
    %138 = math.exp %137 : vector<16x16xf32>
    %139 = arith.mulf %94, %138 : vector<16x16xf32>
    %140 = vector.shape_cast %139 : vector<16x16xf32> to vector<1x16x16xf32>
    %cst_48 = arith.constant dense<0.000000e+00> : vector<1xf32>
    %141 = vector.multi_reduction <add>, %140, %cst_48 [1, 2] : vector<1x16x16xf32> to vector<1xf32>
    %142 = vector.shape_cast %141 : vector<1xf32> to vector<1x1x1xf32>
    %143 = vector.extract %142[0, 0, 0] : f32 from vector<1x1x1xf32>
    %144 = arith.addf %134, %143 : f32
    %cst_49 = arith.constant 1.562500e-02 : f32
    %145 = arith.mulf %144, %cst_49 : f32
    %146 = tpu.iota {dimensions = array<i32: 1>} : vector<1x2xi32>
    %c0_i32 = arith.constant 0 : i32
    %147 = vector.broadcast %c0_i32 : i32 to vector<1x2xi32>
    %148 = arith.cmpi eq, %146, %147 : vector<1x2xi32>
    %149 = vector.broadcast %59 : f32 to vector<1x2xf32>
    %150 = vector.broadcast %145 : f32 to vector<1x2xf32>
    %151 = arith.select %148, %149, %150 : vector<1x2xi1>, vector<1x2xf32>
    %c0_50 = arith.constant 0 : index
    %c0_51 = arith.constant 0 : index
    %152 = vector.load %arg5[%c0_50, %c0_51] : memref<1x2xf32, #tpu.memory_space<vmem>>, vector<1x2xf32>
    tpu.vector_store %arg5[%c0_50, %c0_51], %151 {strides = array<i32>} : memref<1x2xf32, #tpu.memory_space<vmem>>, vector<1x2xf32>,
    return
  }
}

</mosaic_0001>

<llo_original>
// kernel: transfer_net_forward.1
$region0: #{transfer_net_forward.1}
  #allocation0 [shape = 'u32[]', space=smem, size = 0x4, offset = 0x4, fixed_abs, tag = 'smem constant byte address 0x4 - core index']
  #allocation1 [shape = 'u32[72,128]{1,0:T(1,128)}', space=vmem, size = 0x9000, scoped, tag = 'internal scratch']
  %s0 = inlined_call_operand.vmem [shape: f32[8,128], index: 0, kind: input, shape index: {}]
  %s1 = inlined_call_operand.vmem [shape: f32[8,128], index: 1, kind: input, shape index: {}]
  %s2 = inlined_call_operand.vmem [shape: s32[8,1], index: 2, kind: input, shape index: {}]
  %s3 = inlined_call_operand.vmem [shape: f32[128,32], index: 3, kind: input, shape index: {}]
  %s4 = inlined_call_operand.vmem [shape: f32[5,32], index: 4, kind: input, shape index: {}]
  %s5 = inlined_call_operand.vmem [shape: f32[1,2], index: 5, kind: output, shape index: {}]
  %s6 = sld [smem:[#allocation0]]
  $region30: #{transfer_net_forward.1} parent=0
    _
  %s8 = ssub.s32 1, %s6
  %s9 = scalar_select 0, %s8, %s6
  // Predicated region
  $region2: #{transfer_net_forward.1} parent=0 // pred_check
    _
  $region3: #{transfer_net_forward.1} parent=0 // pred_check_branch
    %11 = sbr.rel (0) target = $region5
  $region4: #{transfer_net_forward.1} parent=0 // pred_region
    _
  $region5: #{transfer_net_forward.1} parent=0 // pred_fallthru
    _
  // Predicated region
  $region6: #{transfer_net_forward.1} parent=0 // pred_check
    _
  $region7: #{transfer_net_forward.1} parent=0 // pred_check_branch
    %13 = sbr.rel (0) target = $region9
  $region8: #{transfer_net_forward.1} parent=0 // pred_region
    _
  $region9: #{transfer_net_forward.1} parent=0 // pred_fallthru
    _
  // Predicated region
  $region10: #{transfer_net_forward.1} parent=0 // pred_check
    _
  $region11: #{transfer_net_forward.1} parent=0 // pred_check_branch
    %15 = sbr.rel (0) target = $region13
  $region12: #{transfer_net_forward.1} parent=0 // pred_region
    _
  $region13: #{transfer_net_forward.1} parent=0 // pred_fallthru
    _
  // Predicated region
  $region14: #{transfer_net_forward.1} parent=0 // pred_check
    _
  $region15: #{transfer_net_forward.1} parent=0 // pred_check_branch
    %17 = sbr.rel (0) target = $region17
  $region16: #{transfer_net_forward.1} parent=0 // pred_region
    _
  $region17: #{transfer_net_forward.1} parent=0 // pred_fallthru
    _
  // Predicated region
  $region18: #{transfer_net_forward.1} parent=0 // pred_check
    _
  $region19: #{transfer_net_forward.1} parent=0 // pred_check_branch
    %19 = sbr.rel (0) target = $region21
  $region20: #{transfer_net_forward.1} parent=0 // pred_region
    _
  $region21: #{transfer_net_forward.1} parent=0 // pred_fallthru
    _
  %v21 = vld [vmem:[%s4] sm:$0x1]
  %v22 = vld [vmem:[%s4 + $0x1] sm:$0x3]
  %v23 = vld [vmem:[%s4 + $0x3] sm:$0x1]
  %v24 = vld [vmem:[%s4 + $0x4] sm:$0x1]
  %v25 = vld [vmem:[%s0] sm:$0xff]
  %v26 = vld [vmem:[%s1] sm:$0xff]
  %v27 = vpack.c.bf16 %v26, %v25
  %v28 = vld [vmem:[%s3] sm:$0xff]
  %v29 = vld [vmem:[%s3 + $0x8] sm:$0xff]
  %v30 = vld [vmem:[%s3 + $0x10] sm:$0xff]
  %v31 = vld [vmem:[%s3 + $0x18] sm:$0xff]
  %v32 = vld [vmem:[%s3 + $0x20] sm:$0xff]
  %v33 = vld [vmem:[%s3 + $0x28] sm:$0xff]
  %v34 = vld [vmem:[%s3 + $0x30] sm:$0xff]
  %v35 = vld [vmem:[%s3 + $0x38] sm:$0xff]
  %v36 = vld [vmem:[%s3 + $0x40] sm:$0xff]
  %v37 = vld [vmem:[%s3 + $0x48] sm:$0xff]
  %v38 = vld [vmem:[%s3 + $0x50] sm:$0xff]
  %v39 = vld [vmem:[%s3 + $0x58] sm:$0xff]
  %v40 = vld [vmem:[%s3 + $0x60] sm:$0xff]
  %v41 = vld [vmem:[%s3 + $0x68] sm:$0xff]
  %v42 = vld [vmem:[%s3 + $0x70] sm:$0xff]
  %v43 = vld [vmem:[%s3 + $0x78] sm:$0xff]
  %v44 = vpack.c.bf16 %v29, %v28
  %v45 = vpack.c.bf16 %v31, %v30
  %v46 = vpack.c.bf16 %v33, %v32
  %v47 = vpack.c.bf16 %v35, %v34
  %v48 = vpack.c.bf16 %v37, %v36
  %v49 = vpack.c.bf16 %v39, %v38
  %v50 = vpack.c.bf16 %v41, %v40
  %v51 = vpack.c.bf16 %v43, %v42
  %v52 = vperm.slane %v21, 0
  %53 = vmatpush.bf16.msra.mxu0 %v51
  %54 = vmatpush.bf16.msra.mxu0 %v50
  %55 = vmatpush.bf16.msra.mxu0 %v49
  %56 = vmatpush.bf16.msra.mxu0 %v48
  %57 = vmatpush.bf16.msra.mxu0 %v47
  %58 = vmatpush.bf16.msra.mxu0 %v46
  %59 = vmatpush.bf16.msra.mxu0 %v45
  %60 = vmatpush.bf16.msra.mxu0 %v44
  %61 = vmatmul.bf16.gmra.mxu0 %v27
  %v62 = vpop.f32.mrf.mxu0
  %v63 = vadd.f32 %v52, %v62
  %v64 = vpop.f32.mrf.mxu0
  %v65 = vadd.f32 %v52, %v64
  %66 = vdwg.mxu0
  %vm67 = vcmp.gt.f32.partialorder %v63, 0.0
  %vm68 = vcmp.gt.f32.partialorder %v65, 0.0
  %v69 = vmin.f32 %v63, 0.0
  %v70 = vmin.f32 %v65, 0.0
  %v71 = vmul.f32 %v69, 1.442695
  %v72 = vpow.pop %v71
  %v73 = vmul.f32 %v70, 1.442695
  %v74 = vpow.pop %v73
  %v75 = vsub.f32 %v72, 1.0
  %v76 = vsub.f32 %v74, 1.0
  %v77 = vsel %vm67, %v63, %v75
  %v78 = vsel %vm68, %v65, %v76
  %v79 = vperm.slane %v23, 0
  %vm80 = vcmask 261120
  %v82 = vsel %vm80, %v77, 0
  %v85 = vsel %vm80, %v22, 0
  %87 = vmatpush.xpose.msra.mxu0 0.0
  %88 = vmatpush.xpose.msra.mxu0 0.0
  %89 = vmatpush.xpose.msra.mxu0 0.0
  %90 = vmatpush.xpose.msra.mxu0 0.0
  %91 = vmatpush.xpose.msra.mxu0 0.0
  %92 = vmatpush.xpose.msra.mxu0 0.0
  %93 = vmatpush.xpose.msra.mxu0 0.0
  %94 = vmatpush.xpose.msra.mxu0 0.0
  %95 = vmatpush.xpose.msra.mxu0 0.0
  %96 = vmatpush.xpose.msra.mxu0 0.0
  %97 = vmatpush.xpose.msra.mxu0 0.0
  %98 = vmatpush.xpose.msra.mxu0 0.0
  %99 = vmatpush.xpose.msra.mxu0 0.0
  %100 = vmatpush.xpose.msra.mxu0 0.0
  %101 = vmatpush.xpose.msra.mxu0 0.0
  %102 = vmatpush.xpose.msra.mxu0 %v85
  %103 = vmatmul.f32.gmra.mxu0 %v82
  %v104 = vpop.f32.mrf.mxu0
  %v105 = vadd.f32 %v79, %v104
  %106 = vdwg.mxu0
  %vm107 = vcmask 15360
  %v108 = vsel %vm107, %v105, -inf
  %109 = vmax.xlane.f32.xlu0 %v108
  %v110 = vpop.xlane.xlu0 %109
  %v111 = vsub.f32 %v105, %v110
  %v112 = vmul.f32 %v111, 1.442695
  %v113 = vpow.pop %v112
  %v114 = vsel %vm107, %v113, 0.0
  %115 = vadd.xlane.f32.xlu0 %v114
  %v116 = vpop.xlane.xlu0 %115
  %v117 = vlog2.pop %v116
  %v118 = vmul.f32 %v117, 0.6931472
  %v119 = vsub.f32 %v111, %v118
  %v120 = vld [vmem:[%s2] sm:$0xff]
  %v121 = vlaneseq
  %v122 = vand.u32 %v121, 127
  %123 = vset.pattern.permute.xlu0 0
  %124 = vperm.xlu0 %123, %v120
  %v125 = vpop.permute.xlu0 %124
  %vm126 = vcmp.eq.s32.totalorder %v125, %v122
  %v127 = vsel %vm126, 1, 0
  %v128 = vcvt.s32.f32 %v127
  %v129 = vmul.f32 %v128, %v119
  %v130 = vsel %vm107, %v129, 0.0
  %131 = vadd.xlane.f32.xlu0 %v130
  %v132 = vpop.xlane.xlu0 %131
  %v133 = vsub.f32 0.0, %v132
  %v134 = vperm.slane %v24, 0
  %v135 = vmul.f32 %v128, %v134
  %v136 = vsel %vm107, %v135, 0.0
  %137 = vadd.xlane.f32.xlu0 %v136
  %v138 = vpop.xlane.xlu0 %137
  %v139 = vmul.f32 %v138, %v133
  %vm140 = vcmask 7168
  %v141 = vsel %vm140, %v139, 0.0
  %142 = vadd.xlane.f32.xlu0 %v141
  %v143 = vpop.xlane.xlu0 %142
  %v144 = vrot.slane %v143, 4
  %v145 = vadd.f32 %v143, %v144
  %v146 = vrot.slane %v145, 2
  %v147 = vadd.f32 %v145, %v146
  %v148 = vrot.slane %v147, 1
  %v149 = vadd.f32 %v147, %v148
  %s150 = vtos %v149
  %v151 = vsel %vm140, %v138, 0.0
  %152 = vadd.xlane.f32.xlu0 %v151
  %v153 = vpop.xlane.xlu0 %152
  %v154 = vrot.slane %v153, 4
  %v155 = vadd.f32 %v153, %v154
  %v156 = vrot.slane %v155, 2
  %v157 = vadd.f32 %v155, %v156
  %v158 = vrot.slane %v157, 1
  %v159 = vadd.f32 %v157, %v158
  %s160 = vtos %v159
  %v161 = vstv %s160
  %v162 = vrcp.pop %v161
  %v163 = vmul.f32 %v161, %v162
  %v164 = vsub.f32 1.0, %v163
  %v165 = vmul.f32 %v162, %v164
  %v166 = vadd.f32 %v162, %v165
  %vm167 = vweird.f32 %v161
  %vm168 = vweird.f32 %v162
  %vm169 = vmor %vm167, %vm168
  %v170 = vsel %vm169, %v162, %v166
  %v171 = vand.u32 2147483647, %v161
  %vm172 = vcmp.eq.f32.partialorder %v171, 8.507059e+37
  %v173 = vand.u32 %v161, 2147483648
  %v174 = vor.u32 1.1754944e-38, %v173
  %v175 = vsel %vm172, %v174, %v170
  %s176 = vtos %v175
  %s177 = smul.f32 %s150, %s176
  %v178 = vpack.c.bf16 %v78, %v77
  %v180 = vsel %vm80, %v178, 0
  %182 = vmatpush.bf16.xpose.msra.mxu0 0
  %183 = vmatpush.bf16.xpose.msra.mxu0 0
  %184 = vmatpush.bf16.xpose.msra.mxu0 0
  %185 = vmatpush.bf16.xpose.msra.mxu0 0
  %186 = vmatpush.bf16.xpose.msra.mxu0 0
  %187 = vmatpush.bf16.xpose.msra.mxu0 0
  %188 = vmatpush.bf16.xpose.msra.mxu0 0
  %189 = vmatpush.bf16.xpose.msra.mxu0 %v180
  %190 = vmatmul.bf16.gmra.mxu0 %v180
  %v191 = vpop.f32.mrf.mxu0
  %v192 = vadd.f32 0.0, %v191
  %v193 = vpop.f32.mrf.mxu0
  %v194 = vadd.f32 0.0, %v193
  %195 = vdwg.mxu0
  %v196 = vmul.f32 %v77, %v77
  %v197 = vmul.f32 %v78, %v78
  %v198 = vsel %vm80, %v196, 0.0
  %199 = vadd.xlane.f32.xlu0 %v198
  %v200 = vpop.xlane.xlu0 %199
  %v201 = vsel %vm80, %v197, 0.0
  %202 = vadd.xlane.f32.xlu0 %v201
  %v203 = vpop.xlane.xlu0 %202
  %v205 = vsel %vm80, 1.0, 0
  %v208 = vsel %vm80, %v196, 0
  %v211 = vsel %vm80, %v197, 0
  %213 = vmatpush.xpose.msra.mxu0 0.0
  %214 = vmatpush.xpose.msra.mxu0 0.0
  %215 = vmatpush.xpose.msra.mxu0 0.0
  %216 = vmatpush.xpose.msra.mxu0 0.0
  %217 = vmatpush.xpose.msra.mxu0 0.0
  %218 = vmatpush.xpose.msra.mxu0 0.0
  %219 = vmatpush.xpose.msra.mxu0 0.0
  %220 = vmatpush.xpose.msra.mxu0 0.0
  %221 = vmatpush.xpose.msra.mxu0 0.0
  %222 = vmatpush.xpose.msra.mxu0 0.0
  %223 = vmatpush.xpose.msra.mxu0 0.0
  %224 = vmatpush.xpose.msra.mxu0 0.0
  %225 = vmatpush.xpose.msra.mxu0 0.0
  %226 = vmatpush.xpose.msra.mxu0 0.0
  %227 = vmatpush.xpose.msra.mxu0 %v211
  %228 = vmatpush.xpose.msra.mxu0 %v208
  %229 = vmatmul.f32.gmra.mxu0 %v205
  %v230 = vpop.f32.mrf.mxu0
  %v231 = vadd.f32 0.0, %v230
  %232 = vdwg.mxu0
  %v233 = vperm.slane %v231, 0
  %v234 = vadd.f32 %v200, %v233
  %v235 = vadd.f32 %v203, %v233
  %v236 = vmul.f32 %v192, 2.0
  %v237 = vmul.f32 %v194, 2.0
  %v238 = vsub.f32 %v234, %v236
  %v239 = vsub.f32 %v235, %v237
  %v240 = vmax.f32 %v238, 0.0
  %v241 = vmax.f32 %v239, 0.0
  %vm242 = vcmask 130048
  %v243 = vsel %vm242, %v240, 0.0
  %v244 = vsel %vm242, %v241, 0.0
  %v245 = vadd.f32 %v243, %v244
  %246 = vadd.xlane.f32.xlu0 %v245
  %v247 = vpop.xlane.xlu0 %246
  %v248 = vrot.slane %v247, 4
  %v249 = vadd.f32 %v247, %v248
  %v250 = vrot.slane %v249, 2
  %v251 = vadd.f32 %v249, %v250
  %v252 = vrot.slane %v251, 1
  %v253 = vadd.f32 %v251, %v252
  %s254 = vtos %v253
  %s255 = smul.f32 %s254, 0.0010416667
  %s256 = smax.f32 %s255, 1e-12
  %v257 = vstv %s256
  %v258 = vrcp.pop %v257
  %v259 = vmul.f32 %v257, %v258
  %v260 = vsub.f32 1.0, %v259
  %v261 = vmul.f32 %v258, %v260
  %v262 = vadd.f32 %v258, %v261
  %vm263 = vweird.f32 %v257
  %vm264 = vweird.f32 %v258
  %vm265 = vmor %vm263, %vm264
  %v266 = vsel %vm265, %v258, %v262
  %v267 = vand.u32 2147483647, %v257
  %vm268 = vcmp.eq.f32.partialorder %v267, 8.507059e+37
  %v269 = vand.u32 %v257, 2147483648
  %v270 = vor.u32 1.1754944e-38, %v269
  %v271 = vsel %vm268, %v270, %v266
  %s272 = vtos %v271
  %v273 = vlaneseq
  %v274 = vshrl.u32 %v273, 7
  %v275 = vadd.s32 %v274, 8
  %vm276 = vcmp.lt.s32.totalorder %v274, 8
  %vm277 = vcmp.lt.s32.totalorder %v275, 8
  %v278 = vsel %vm276, 1.0, -1.0
  %v279 = vsel %vm277, 1.0, -1.0
  %vm280 = vcmp.lt.s32.totalorder %v122, 8
  %v281 = vsel %vm280, 1.0, -1.0
  %v282 = vmul.f32 %v278, %v281
  %v283 = vmul.f32 %v279, %v281
  %s284 = smul.f32 %s272, -1.0
  %v285 = vstv %s284
  %v286 = vmul.f32 %v240, %v285
  %v287 = vmul.f32 %v241, %v285
  %v288 = vmul.f32 %v286, 1.442695
  %v289 = vpow.pop %v288
  %v290 = vmul.f32 %v287, 1.442695
  %v291 = vpow.pop %v290
  %v292 = vmul.f32 %v282, %v289
  %v293 = vmul.f32 %v283, %v291
  %v294 = vsel %vm242, %v292, 0.0
  %v295 = vsel %vm242, %v293, 0.0
  %v296 = vadd.f32 %v294, %v295
  %297 = vadd.xlane.f32.xlu0 %v296
  %v298 = vpop.xlane.xlu0 %297
  %v299 = vrot.slane %v298, 4
  %v300 = vadd.f32 %v298, %v299
  %v301 = vrot.slane %v300, 2
  %v302 = vadd.f32 %v300, %v301
  %v303 = vrot.slane %v302, 1
  %v304 = vadd.f32 %v302, %v303
  %s305 = vtos %v304
  %s306 = sadd.f32 %s305, 0.0
  %s307 = smul.f32 %s272, -0.5
  %v308 = vstv %s307
  %v309 = vmul.f32 %v240, %v308
  %v310 = vmul.f32 %v241, %v308
  %v311 = vmul.f32 %v309, 1.442695
  %v312 = vpow.pop %v311
  %v313 = vmul.f32 %v310, 1.442695
  %v314 = vpow.pop %v313
  %v315 = vmul.f32 %v282, %v312
  %v316 = vmul.f32 %v283, %v314
  %v317 = vsel %vm242, %v315, 0.0
  %v318 = vsel %vm242, %v316, 0.0
  %v319 = vadd.f32 %v317, %v318
  %320 = vadd.xlane.f32.xlu0 %v319
  %v321 = vpop.xlane.xlu0 %320
  %v322 = vrot.slane %v321, 4
  %v323 = vadd.f32 %v321, %v322
  %v324 = vrot.slane %v323, 2
  %v325 = vadd.f32 %v323, %v324
  %v326 = vrot.slane %v325, 1
  %v327 = vadd.f32 %v325, %v326
  %s328 = vtos %v327
  %s329 = sadd.f32 %s306, %s328
  %s330 = smul.f32 %s272, -0.25
  %v331 = vstv %s330
  %v332 = vmul.f32 %v240, %v331
  %v333 = vmul.f32 %v241, %v331
  %v334 = vmul.f32 %v332, 1.442695
  %v335 = vpow.pop %v334
  %v336 = vmul.f32 %v333, 1.442695
  %v337 = vpow.pop %v336
  %v338 = vmul.f32 %v282, %v335
  %v339 = vmul.f32 %v283, %v337
  %v340 = vsel %vm242, %v338, 0.0
  %v341 = vsel %vm242, %v339, 0.0
  %v342 = vadd.f32 %v340, %v341
  %343 = vadd.xlane.f32.xlu0 %v342
  %v344 = vpop.xlane.xlu0 %343
  %v345 = vrot.slane %v344, 4
  %v346 = vadd.f32 %v344, %v345
  %v347 = vrot.slane %v346, 2
  %v348 = vadd.f32 %v346, %v347
  %v349 = vrot.slane %v348, 1
  %v350 = vadd.f32 %v348, %v349
  %s351 = vtos %v350
  %s352 = sadd.f32 %s329, %s351
  %s353 = smul.f32 %s272, -0.125
  %v354 = vstv %s353
  %v355 = vmul.f32 %v240, %v354
  %v356 = vmul.f32 %v241, %v354
  %v357 = vmul.f32 %v355, 1.442695
  %v358 = vpow.pop %v357
  %v359 = vmul.f32 %v356, 1.442695
  %v360 = vpow.pop %v359
  %v361 = vmul.f32 %v282, %v358
  %v362 = vmul.f32 %v283, %v360
  %v363 = vsel %vm242, %v361, 0.0
  %v364 = vsel %vm242, %v362, 0.0
  %v365 = vadd.f32 %v363, %v364
  %366 = vadd.xlane.f32.xlu0 %v365
  %v367 = vpop.xlane.xlu0 %366
  %v368 = vrot.slane %v367, 4
  %v369 = vadd.f32 %v367, %v368
  %v370 = vrot.slane %v369, 2
  %v371 = vadd.f32 %v369, %v370
  %v372 = vrot.slane %v371, 1
  %v373 = vadd.f32 %v371, %v372
  %s374 = vtos %v373
  %s375 = sadd.f32 %s352, %s374
  %s376 = smul.f32 %s272, -0.0625
  %v377 = vstv %s376
  %v378 = vmul.f32 %v240, %v377
  %v379 = vmul.f32 %v241, %v377
  %v380 = vmul.f32 %v378, 1.442695
  %v381 = vpow.pop %v380
  %v382 = vmul.f32 %v379, 1.442695
  %v383 = vpow.pop %v382
  %v384 = vmul.f32 %v282, %v381
  %v385 = vmul.f32 %v283, %v383
  %v386 = vsel %vm242, %v384, 0.0
  %v387 = vsel %vm242, %v385, 0.0
  %v388 = vadd.f32 %v386, %v387
  %389 = vadd.xlane.f32.xlu0 %v388
  %v390 = vpop.xlane.xlu0 %389
  %v391 = vrot.slane %v390, 4
  %v392 = vadd.f32 %v390, %v391
  %v393 = vrot.slane %v392, 2
  %v394 = vadd.f32 %v392, %v393
  %v395 = vrot.slane %v394, 1
  %v396 = vadd.f32 %v394, %v395
  %s397 = vtos %v396
  %s398 = sadd.f32 %s375, %s397
  %s399 = smul.f32 %s398, 0.015625
  %vm400 = vcmp.eq.s32.totalorder %v122, 0
  %v401 = vstv %s177
  %v402 = vstv %s399
  %v403 = vsel %vm400, %v401, %v402
  %vm404 = vcmask 8192
  %405 = vst.msk [vmem:[%s5] sm:$0x1] %vm404, %v403
  // Predicated region
  $region22: #{transfer_net_forward.1} parent=0 // pred_check
    _
  $region23: #{transfer_net_forward.1} parent=0 // pred_check_branch
    %407 = sbr.rel (0) target = $region25
  $region24: #{transfer_net_forward.1} parent=0 // pred_region
    _
  $region25: #{transfer_net_forward.1} parent=0 // pred_fallthru
    _
  // Predicated region
  $region26: #{transfer_net_forward.1} parent=0 // pred_check
    _
  $region27: #{transfer_net_forward.1} parent=0 // pred_check_branch
    %409 = sbr.rel (0) target = $region29
  $region28: #{transfer_net_forward.1} parent=0 // pred_region
    _
  $region29: #{transfer_net_forward.1} parent=0 // pred_fallthru
    _

</llo_original>
